<compile_context>
chip_gen: v5e
topology: v5e:2x2
jax: 0.10.0
libtpu: 0.0.40
codegen_flags: <defaults>
</compile_context>

<pallas_src>
import functools

import jax
import jax.numpy as jnp
from jax.experimental import pallas as pl
from jax.experimental.pallas import tpu as pltpu

_LANES = 128


def _mlp_kernel(x_ref, w1_ref, b1_ref, w2_ref, b2_ref, o_ref):
    """Fused fc1 -> ReLU -> fc2 on a lane-interleaved (S, 128) slab.

    x_ref/o_ref: (S, 128) VMEM.  Lane 2k holds feature 0 and lane 2k+1 holds
      feature 1 of one batch element (row-major flattening of the (B, 2) input).
    w*_ref: (2, 2) SMEM, layout (in, out)  (== PyTorch fc.weight.T).
    b*_ref: (2,)  SMEM.
    """
    x = x_ref[...]                                    # (S, 128) f32
    shape = x.shape

    lane = jax.lax.broadcasted_iota(jnp.int32, shape, 1)
    is_f0 = lane % 2 == 0                             # even lanes hold feature 0

    # Each batch element occupies the lane pair (2k, 2k+1); fetch the partner
    # feature with a unit lane rotate on the XLU.  Selecting between the +1 and
    # -1 rotations against a rotated lane iota makes this independent of the
    # rotate sign convention, and the wrap-around lanes are never selected
    # (pairs never straddle a 128-lane row).
    lane_f = lane.astype(jnp.float32)
    partner_lane = jnp.where(is_f0, lane_f + 1.0, lane_f - 1.0)
    take_a = pltpu.roll(lane_f, 127, axis=1) == partner_lane

    def swap_pair(v):
        return jnp.where(
            take_a, pltpu.roll(v, 127, axis=1), pltpu.roll(v, 1, axis=1)
        )

    def linear(v, w_ref, b_ref):
        # (in, out)-layout 2x2 weights read as SMEM scalars and splat per lane:
        #   even lanes: out0 = w[0,0]*f0 + w[1,0]*f1 + b[0]
        #   odd  lanes: out1 = w[1,1]*f1 + w[0,1]*f0 + b[1]
        w_self = jnp.where(is_f0, w_ref[0, 0], w_ref[1, 1])
        w_part = jnp.where(is_f0, w_ref[1, 0], w_ref[0, 1])
        bias = jnp.where(is_f0, b_ref[0], b_ref[1])
        return w_self * v + w_part * swap_pair(v) + bias

    h = jnp.maximum(linear(x, w1_ref, b1_ref), 0.0)   # fc1 + ReLU (VPU only)
    y = linear(h, w2_ref, b2_ref)                     # fc2
    o_ref[...] = y.astype(o_ref.dtype)                # single dense, unmasked store


@functools.partial(jax.jit, static_argnames=("block_rows",))
def example_net_forward(x, w1, b1, w2, b2, block_rows=512):
    """Fused fc1 -> relu -> fc2 (ExampleNet.forward).

    Args:
      x:  (B, 2) float32, PyTorch-style (batch, features) input.
      w1: (2, 2) = fc1.weight.T  -- (in, out) layout!  Passing the raw PyTorch
          fc.weight (out, in) silently gives wrong results since it is 2x2.
      b1: (2,)
      w2: (2, 2) = fc2.weight.T
      b2: (2,)
      block_rows: rows of 128 lanes (64 batch elements each) per grid step.
        Sized for DMA efficiency, not VMEM: 512 rows = 32768 batch elements =
        256 KiB per input block (~1 MiB live with double buffering), far below
        the VMEM budget of v5e/v6e/v7x.  Large batches then produce multi-step
        grids, which is what lets v7x shard the "parallel" axis over its two
        TensorCores.  (pipeline_mode=pl.Buffered(3) on the x spec is an option
        if small-batch, few-step latency ever matters.)

    Returns (B, 2) float32.
    """
    if x.ndim != 2 or x.shape[1] != w1.shape[0]:
        raise ValueError(f"expected x of shape (B, {w1.shape[0]}), got {x.shape}")
    assert w1.shape == (2, 2) and w2.shape == (2, 2)
    assert b1.shape == (2,) and b2.shape == (2,)

    B = x.shape[0]
    n = 2 * B

    # Row-major flatten is free; feature pairs stay interleaved along lanes.
    flat = x.reshape(-1)
    pad = (-n) % _LANES
    if pad:  # only for batches that are not a multiple of 64
        flat = jnp.pad(flat, (0, pad))
    rows = flat.shape[0] // _LANES
    x2d = flat.reshape(rows, _LANES)                  # free reshape

    # Clamp the block to the array (keeps the (8,128) rule: sublane dim is a
    # multiple of 8 or equals the full dim).  Ragged last blocks are handled by
    # Pallas OOB masking, so `rows` itself never needs padding.
    br = min(block_rows, rows)
    if br < rows and br % 8:
        br = max(8, br - br % 8)
    grid = (pl.cdiv(rows, br),)

    smem = pl.BlockSpec(memory_space=pltpu.MemorySpace.SMEM)
    elems = rows * _LANES

    out2d = pl.pallas_call(
        _mlp_kernel,
        out_shape=jax.ShapeDtypeStruct((rows, _LANES), x.dtype),
        grid=grid,
        in_specs=[
            pl.BlockSpec((br, _LANES), lambda i: (i, 0)),  # x slab (lane+sublane dense)
            smem,  # w1 scalars
            smem,  # b1
            smem,  # w2
            smem,  # b2
        ],
        out_specs=pl.BlockSpec((br, _LANES), lambda i: (i, 0)),
        compiler_params=pltpu.CompilerParams(
            dimension_semantics=("parallel",),
        ),
        cost_estimate=pl.CostEstimate(
            flops=20 * elems, transcendentals=0, bytes_accessed=8 * elems + 48
        ),
    )(x2d, w1, b1, w2, b2)

    out_flat = out2d.reshape(-1)                      # free reshape
    if pad:
        out_flat = out_flat[:n]
    return out_flat.reshape(B, 2)                     # free when no pad was needed


def make_nnrepair_params():
    # PyTorch module: fc1.weight = [[-1, 0.5], [2, 1]].T, so fc1.weight.T (the
    # (in, out) matrix this kernel consumes) is [[-1, 0.5], [2, 1]]; same for fc2.
    w1 = jnp.array([[-1.0, 0.5], [2.0, 1.0]], dtype=jnp.float32)   # fc1.weight.T
    b1 = jnp.zeros((2,), dtype=jnp.float32)
    w2 = jnp.array([[2.0, -0.5], [-1.5, 3.0]], dtype=jnp.float32)  # fc2.weight.T
    b2 = jnp.zeros((2,), dtype=jnp.float32)
    return w1, b1, w2, b2


def _reference(x, w1, b1, w2, b2):
    return jnp.maximum(x @ w1 + b1[None, :], 0.0) @ w2 + b2[None, :]


if __name__ == "__main__":
    w1, b1, w2, b2 = make_nnrepair_params()

    # Small batch (single partial row -> exercises the flat-pad path).
    x_small = jax.random.normal(jax.random.PRNGKey(0), (8, 2), dtype=jnp.float32)
    out_small = jax.block_until_ready(example_net_forward(x_small, w1, b1, w2, b2))
    assert out_small.shape == (8, 2)
    assert jnp.allclose(out_small, _reference(x_small, w1, b1, w2, b2),
                        atol=1e-5, rtol=1e-5)

    # The module's canonical nnrepair inputs (batch 3).
    x_canon = jnp.array([[2.5, -1.0], [0.5, 0.5], [0.0, 4.0]], dtype=jnp.float32)
    out_canon = jax.block_until_ready(example_net_forward(x_canon, w1, b1, w2, b2))
    assert out_canon.shape == (3, 2)
    assert jnp.allclose(out_canon, _reference(x_canon, w1, b1, w2, b2),
                        atol=1e-5, rtol=1e-5)

    # Aligned batch (B % 64 == 0): the zero-extra-copy path, no pad / no slice.
    x_big = jax.random.normal(jax.random.PRNGKey(1), (4096, 2), dtype=jnp.float32)
    out_big = jax.block_until_ready(example_net_forward(x_big, w1, b1, w2, b2))
    assert jnp.allclose(out_big, _reference(x_big, w1, b1, w2, b2),
                        atol=1e-5, rtol=1e-5)

    # Multi-step grid with a ragged final block (small block_rows to force it).
    x_rag = jax.random.normal(jax.random.PRNGKey(2), (700, 2), dtype=jnp.float32)
    out_rag = jax.block_until_ready(
        example_net_forward(x_rag, w1, b1, w2, b2, block_rows=8))
    assert jnp.allclose(out_rag, _reference(x_rag, w1, b1, w2, b2),
                        atol=1e-5, rtol=1e-5)

    print("KERNEL_OK")
</pallas_src>

<mosaic_0001>
module attributes {stable_mosaic.version = 11 : i64} {
  func.func @_mlp_kernel(%arg0: i32, %arg1: memref<1x128xf32, #tpu.memory_space<vmem>>, %arg2: memref<2x2xf32, #tpu.memory_space<smem>>, %arg3: memref<2xf32, #tpu.memory_space<smem>>, %arg4: memref<2x2xf32, #tpu.memory_space<smem>>, %arg5: memref<2xf32, #tpu.memory_space<smem>>, %arg6: memref<1x128xf32, #tpu.memory_space<vmem>>) attributes {dimension_semantics = [#tpu.dimension_semantics<parallel>], iteration_bounds = array<i64: 1>, scalar_prefetch = 0 : i64, scratch_operands = 0 : i64, tpu.core_type = #tpu.core_type<tc>, window_params = [{transform_indices = @transform_0, window_bounds = array<i64: 1, 128>}, {transform_indices = @transform_1, window_bounds = array<i64: 2, 2>}, {transform_indices = @transform_2, window_bounds = array<i64: 2>}, {transform_indices = @transform_3, window_bounds = array<i64: 2, 2>}, {transform_indices = @transform_4, window_bounds = array<i64: 2>}, {transform_indices = @transform_5, window_bounds = array<i64: 1, 128>}]} {
    %c0 = arith.constant 0 : index
    %c0_0 = arith.constant 0 : index
    %0 = vector.load %arg1[%c0, %c0_0] : memref<1x128xf32, #tpu.memory_space<vmem>>, vector<1x128xf32>
    %1 = tpu.iota {dimensions = array<i32: 1>} : vector<1x128xi32>
    %c2_i32 = arith.constant 2 : i32
    %c0_i32 = arith.constant 0 : i32
    %2 = arith.cmpi eq, %c2_i32, %c0_i32 : i32
    %c1_i32 = arith.constant 1 : i32
    %3 = arith.select %2, %c1_i32, %c2_i32 : i32
    %4 = vector.broadcast %3 : i32 to vector<1x128xi32>
    %5 = arith.remsi %1, %4 : vector<1x128xi32>
    %c0_i32_1 = arith.constant 0 : i32
    %6 = vector.broadcast %c0_i32_1 : i32 to vector<1x128xi32>
    %7 = arith.cmpi ne, %5, %6 : vector<1x128xi32>
    %c0_i32_2 = arith.constant 0 : i32
    %8 = vector.broadcast %c0_i32_2 : i32 to vector<1x128xi32>
    %9 = arith.cmpi slt, %5, %8 : vector<1x128xi32>
    %c0_i32_3 = arith.constant 0 : i32
    %10 = arith.cmpi slt, %3, %c0_i32_3 : i32
    %11 = vector.broadcast %10 : i1 to vector<1x128xi1>
    %12 = vector.broadcast %11 : vector<1x128xi1> to vector<1x128xi1>
    %13 = arith.xori %9, %12 : vector<1x128xi1>
    %14 = arith.andi %13, %7 : vector<1x128xi1>
    %15 = vector.broadcast %3 : i32 to vector<1x128xi32>
    %16 = arith.addi %5, %15 : vector<1x128xi32>
    %17 = arith.select %14, %16, %5 : vector<1x128xi1>, vector<1x128xi32>
    %c0_i32_4 = arith.constant 0 : i32
    %18 = vector.broadcast %c0_i32_4 : i32 to vector<1x128xi32>
    %19 = arith.cmpi eq, %17, %18 : vector<1x128xi32>
    %20 = arith.sitofp %1 : vector<1x128xi32> to vector<1x128xf32>
    %cst = arith.constant 1.000000e+00 : f32
    %21 = vector.broadcast %cst : f32 to vector<1x128xf32>
    %22 = arith.addf %20, %21 : vector<1x128xf32>
    %cst_5 = arith.constant 1.000000e+00 : f32
    %23 = vector.broadcast %cst_5 : f32 to vector<1x128xf32>
    %24 = arith.subf %20, %23 : vector<1x128xf32>
    %25 = arith.select %19, %22, %24 : vector<1x128xi1>, vector<1x128xf32>
    %c127_i32 = arith.constant 127 : i32
    %26 = tpu.dynamic_rotate %20 by %c127_i32 dim 1 : vector<1x128xf32>, i32 -> vector<1x128xf32>
    %27 = arith.cmpf oeq, %26, %25 : vector<1x128xf32>
    %c0_6 = arith.constant 0 : index
    %c0_7 = arith.constant 0 : index
    %28 = memref.load %arg2[%c0_6, %c0_7] : memref<2x2xf32, #tpu.memory_space<smem>>
    %c1 = arith.constant 1 : index
    %c1_8 = arith.constant 1 : index
    %29 = memref.load %arg2[%c1, %c1_8] : memref<2x2xf32, #tpu.memory_space<smem>>
    %30 = vector.broadcast %28 : f32 to vector<1x128xf32>
    %31 = vector.broadcast %29 : f32 to vector<1x128xf32>
    %32 = arith.select %19, %30, %31 : vector<1x128xi1>, vector<1x128xf32>
    %c1_9 = arith.constant 1 : index
    %c0_10 = arith.constant 0 : index
    %33 = memref.load %arg2[%c1_9, %c0_10] : memref<2x2xf32, #tpu.memory_space<smem>>
    %c0_11 = arith.constant 0 : index
    %c1_12 = arith.constant 1 : index
    %34 = memref.load %arg2[%c0_11, %c1_12] : memref<2x2xf32, #tpu.memory_space<smem>>
    %35 = vector.broadcast %33 : f32 to vector<1x128xf32>
    %36 = vector.broadcast %34 : f32 to vector<1x128xf32>
    %37 = arith.select %19, %35, %36 : vector<1x128xi1>, vector<1x128xf32>
    %c0_13 = arith.constant 0 : index
    %38 = memref.load %arg3[%c0_13] : memref<2xf32, #tpu.memory_space<smem>>
    %c1_14 = arith.constant 1 : index
    %39 = memref.load %arg3[%c1_14] : memref<2xf32, #tpu.memory_space<smem>>
    %40 = vector.broadcast %38 : f32 to vector<1x128xf32>
    %41 = vector.broadcast %39 : f32 to vector<1x128xf32>
    %42 = arith.select %19, %40, %41 : vector<1x128xi1>, vector<1x128xf32>
    %43 = arith.mulf %32, %0 : vector<1x128xf32>
    %c127_i32_15 = arith.constant 127 : i32
    %44 = tpu.dynamic_rotate %0 by %c127_i32_15 dim 1 : vector<1x128xf32>, i32 -> vector<1x128xf32>
    %c1_i32_16 = arith.constant 1 : i32
    %45 = tpu.dynamic_rotate %0 by %c1_i32_16 dim 1 : vector<1x128xf32>, i32 -> vector<1x128xf32>
    %46 = arith.select %27, %44, %45 : vector<1x128xi1>, vector<1x128xf32>
    %47 = arith.mulf %37, %46 : vector<1x128xf32>
    %48 = arith.addf %43, %47 : vector<1x128xf32>
    %49 = arith.addf %48, %42 : vector<1x128xf32>
    %cst_17 = arith.constant 0.000000e+00 : f32
    %50 = vector.broadcast %cst_17 : f32 to vector<1x128xf32>
    %51 = arith.maximumf %49, %50 : vector<1x128xf32>
    %c0_18 = arith.constant 0 : index
    %c0_19 = arith.constant 0 : index
    %52 = memref.load %arg4[%c0_18, %c0_19] : memref<2x2xf32, #tpu.memory_space<smem>>
    %c1_20 = arith.constant 1 : index
    %c1_21 = arith.constant 1 : index
    %53 = memref.load %arg4[%c1_20, %c1_21] : memref<2x2xf32, #tpu.memory_space<smem>>
    %54 = vector.broadcast %52 : f32 to vector<1x128xf32>
    %55 = vector.broadcast %53 : f32 to vector<1x128xf32>
    %56 = arith.select %19, %54, %55 : vector<1x128xi1>, vector<1x128xf32>
    %c1_22 = arith.constant 1 : index
    %c0_23 = arith.constant 0 : index
    %57 = memref.load %arg4[%c1_22, %c0_23] : memref<2x2xf32, #tpu.memory_space<smem>>
    %c0_24 = arith.constant 0 : index
    %c1_25 = arith.constant 1 : index
    %58 = memref.load %arg4[%c0_24, %c1_25] : memref<2x2xf32, #tpu.memory_space<smem>>
    %59 = vector.broadcast %57 : f32 to vector<1x128xf32>
    %60 = vector.broadcast %58 : f32 to vector<1x128xf32>
    %61 = arith.select %19, %59, %60 : vector<1x128xi1>, vector<1x128xf32>
    %c0_26 = arith.constant 0 : index
    %62 = memref.load %arg5[%c0_26] : memref<2xf32, #tpu.memory_space<smem>>
    %c1_27 = arith.constant 1 : index
    %63 = memref.load %arg5[%c1_27] : memref<2xf32, #tpu.memory_space<smem>>
    %64 = vector.broadcast %62 : f32 to vector<1x128xf32>
    %65 = vector.broadcast %63 : f32 to vector<1x128xf32>
    %66 = arith.select %19, %64, %65 : vector<1x128xi1>, vector<1x128xf32>
    %67 = arith.mulf %56, %51 : vector<1x128xf32>
    %c127_i32_28 = arith.constant 127 : i32
    %68 = tpu.dynamic_rotate %51 by %c127_i32_28 dim 1 : vector<1x128xf32>, i32 -> vector<1x128xf32>
    %c1_i32_29 = arith.constant 1 : i32
    %69 = tpu.dynamic_rotate %51 by %c1_i32_29 dim 1 : vector<1x128xf32>, i32 -> vector<1x128xf32>
    %70 = arith.select %27, %68, %69 : vector<1x128xi1>, vector<1x128xf32>
    %71 = arith.mulf %61, %70 : vector<1x128xf32>
    %72 = arith.addf %67, %71 : vector<1x128xf32>
    %73 = arith.addf %72, %66 : vector<1x128xf32>
    %c0_30 = arith.constant 0 : index
    %c0_31 = arith.constant 0 : index
    %74 = vector.load %arg6[%c0_30, %c0_31] : memref<1x128xf32, #tpu.memory_space<vmem>>, vector<1x128xf32>
    tpu.vector_store %arg6[%c0_30, %c0_31], %73 {strides = array<i32>} : memref<1x128xf32, #tpu.memory_space<vmem>>, vector<1x128xf32>,
    return
  }
  func.func @transform_0(%arg0: i32) -> (i32, i32) {
    %c0_i32 = arith.constant 0 : i32
    %c0_i32_0 = arith.constant 0 : i32
    return %arg0, %c0_i32 : i32, i32
  }
  func.func @transform_1(%arg0: i32) -> (i32, i32) {
    %c0_i32 = arith.constant 0 : i32
    %c0_i32_0 = arith.constant 0 : i32
    %c0_i32_1 = arith.constant 0 : i32
    return %c0_i32, %c0_i32_0 : i32, i32
  }
  func.func @transform_2(%arg0: i32) -> i32 {
    %c0_i32 = arith.constant 0 : i32
    %c0_i32_0 = arith.constant 0 : i32
    return %c0_i32 : i32
  }
  func.func @transform_3(%arg0: i32) -> (i32, i32) {
    %c0_i32 = arith.constant 0 : i32
    %c0_i32_0 = arith.constant 0 : i32
    %c0_i32_1 = arith.constant 0 : i32
    return %c0_i32, %c0_i32_0 : i32, i32
  }
  func.func @transform_4(%arg0: i32) -> i32 {
    %c0_i32 = arith.constant 0 : i32
    %c0_i32_0 = arith.constant 0 : i32
    return %c0_i32 : i32
  }
  func.func @transform_5(%arg0: i32) -> (i32, i32) {
    %c0_i32 = arith.constant 0 : i32
    %c0_i32_0 = arith.constant 0 : i32
    return %arg0, %c0_i32 : i32, i32
  }
}

</mosaic_0001>

<llo_original>
// kernel: example_net_forward.1
$region0: #{example_net_forward.1}
  #allocation0 [shape = 'u32[]', space=smem, size = 0x4, offset = 0x4, fixed_abs, tag = 'smem constant byte address 0x4 - core index']
  #allocation1 [shape = 'u32[72,128]{1,0:T(1,128)}', space=vmem, size = 0x9000, scoped, tag = 'internal scratch']
  %s0 = inlined_call_operand.vmem [shape: f32[1,128], index: 0, kind: input, shape index: {}]
  %s1 = inlined_call_operand.vmem [shape: f32[2,2], index: 1, kind: input, shape index: {}]
  %s2 = inlined_call_operand.vmem [shape: f32[2], index: 2, kind: input, shape index: {}]
  %s3 = inlined_call_operand.vmem [shape: f32[2,2], index: 3, kind: input, shape index: {}]
  %s4 = inlined_call_operand.vmem [shape: f32[2], index: 4, kind: input, shape index: {}]
  %s5 = inlined_call_operand.vmem [shape: f32[1,128], index: 5, kind: output, shape index: {}]
  %s6 = sld [smem:[#allocation0]]
  $region46: #{example_net_forward.1} parent=0
    _
  %s8 = ssub.s32 1, %s6
  %s9 = scalar_select 0, %s8, %s6
  $region1: #{example_net_forward.1} parent=0
    #allocation2 [shape = 'u8[1024]{0}', space=smem, size = 0x400, scoped, tag = 'input window, operand 1, single buffered']
    #allocation3 [shape = 's32[1]{0}', space=sflag, size = 0x4, scoped, tag = 'scoped memory for example_net_forward.1']
    #allocation4 [shape = 'u8[512]{0}', space=smem, size = 0x200, scoped, tag = 'input window, operand 2, single buffered']
    #allocation5 [shape = 's32[1]{0}', space=sflag, size = 0x4, scoped, tag = 'scoped memory for example_net_forward.1']
    #allocation6 [shape = 'u8[1024]{0}', space=smem, size = 0x400, scoped, tag = 'input window, operand 3, single buffered']
    #allocation7 [shape = 'u8[512]{0}', space=smem, size = 0x200, scoped, tag = 'input window, operand 4, single buffered']
    #allocation8 [shape = 's32[1]{0}', space=sflag, size = 0x4, scoped, tag = 'scoped memory for example_net_forward.1']
    %10 = vsyncpa [#allocation3], 0
    %11 = vsyncpa [#allocation5], 0
    %12 = vsyncpa [#allocation8], 0
    // Predicated region
    $region2: #{example_net_forward.1} parent=1 // pred_check
      _
    $region3: #{example_net_forward.1} parent=1 // pred_check_branch
      %14 = sbr.rel (0) target = $region5
    $region4: #{example_net_forward.1} parent=1 // pred_region
      _
    $region5: #{example_net_forward.1} parent=1 // pred_fallthru
      _
    // Predicated region
    $region6: #{example_net_forward.1} parent=1 // pred_check
      _
    $region7: #{example_net_forward.1} parent=1 // pred_check_branch
      %16 = sbr.rel (0) target = $region9
    $region8: #{example_net_forward.1} parent=1 // pred_region
      %18 = vsyncadd [#allocation3], 0
      %s20 = sshll.u32 %s1, 4
      %s21 = int_to_ptr.vmem [resolvable:$true] %s20
      %23 = dma.vmem_to_smem %s21, 32, [#allocation2], [#allocation3]
    $region9: #{example_net_forward.1} parent=1 // pred_fallthru
      _
    // Predicated region
    $region10: #{example_net_forward.1} parent=1 // pred_check
      _
    $region11: #{example_net_forward.1} parent=1 // pred_check_branch
      %25 = sbr.rel (0) target = $region13
    $region12: #{example_net_forward.1} parent=1 // pred_region
      %27 = vsyncadd [#allocation5], 0
      %s29 = sshll.u32 %s2, 4
      %s30 = int_to_ptr.vmem [resolvable:$true] %s29
      %32 = dma.vmem_to_smem %s30, 16, [#allocation4], [#allocation5]
    $region13: #{example_net_forward.1} parent=1 // pred_fallthru
      _
    // Predicated region
    $region14: #{example_net_forward.1} parent=1 // pred_check
      _
    $region15: #{example_net_forward.1} parent=1 // pred_check_branch
      %34 = sbr.rel (0) target = $region17
    $region16: #{example_net_forward.1} parent=1 // pred_region
      %36 = vsyncadd [#allocation5], 0
      %s38 = sshll.u32 %s3, 4
      %s39 = int_to_ptr.vmem [resolvable:$true] %s38
      %41 = dma.vmem_to_smem %s39, 32, [#allocation6], [#allocation5]
    $region17: #{example_net_forward.1} parent=1 // pred_fallthru
      _
    // Predicated region
    $region18: #{example_net_forward.1} parent=1 // pred_check
      _
    $region19: #{example_net_forward.1} parent=1 // pred_check_branch
      %43 = sbr.rel (0) target = $region21
    $region20: #{example_net_forward.1} parent=1 // pred_region
      %45 = vsyncadd [#allocation8], 0
      %s47 = sshll.u32 %s4, 4
      %s48 = int_to_ptr.vmem [resolvable:$true] %s47
      %50 = dma.vmem_to_smem %s48, 16, [#allocation7], [#allocation8]
    $region21: #{example_net_forward.1} parent=1 // pred_fallthru
      _
    // Predicated region
    $region22: #{example_net_forward.1} parent=1 // pred_check
      _
    $region23: #{example_net_forward.1} parent=1 // pred_check_branch
      %52 = sbr.rel (0) target = $region25
    $region24: #{example_net_forward.1} parent=1 // pred_region
      %54 = dma.done [#allocation3], 32
    $region25: #{example_net_forward.1} parent=1 // pred_fallthru
      _
    // Predicated region
    $region26: #{example_net_forward.1} parent=1 // pred_check
      _
    $region27: #{example_net_forward.1} parent=1 // pred_check_branch
      %56 = sbr.rel (0) target = $region29
    $region28: #{example_net_forward.1} parent=1 // pred_region
      %58 = dma.done [#allocation5], 16
    $region29: #{example_net_forward.1} parent=1 // pred_fallthru
      _
    // Predicated region
    $region30: #{example_net_forward.1} parent=1 // pred_check
      _
    $region31: #{example_net_forward.1} parent=1 // pred_check_branch
      %60 = sbr.rel (0) target = $region33
    $region32: #{example_net_forward.1} parent=1 // pred_region
      %62 = dma.done [#allocation5], 32
    $region33: #{example_net_forward.1} parent=1 // pred_fallthru
      _
    // Predicated region
    $region34: #{example_net_forward.1} parent=1 // pred_check
      _
    $region35: #{example_net_forward.1} parent=1 // pred_check_branch
      %64 = sbr.rel (0) target = $region37
    $region36: #{example_net_forward.1} parent=1 // pred_region
      %66 = dma.done [#allocation8], 16
    $region37: #{example_net_forward.1} parent=1 // pred_fallthru
      _
    %67 = sfence
    %v68 = vld [vmem:[%s0] sm:$0x1]
    %v69 = vlaneseq
    %v70 = vand.u32 %v69, 127
    %vm71 = vcmp.lt.s32.totalorder %v70, 0
    %v72 = vsub.s32 0, %v70
    %v73 = vsel %vm71, %v72, %v70
    %v74 = vshrl.u32 %v73, 1
    %v75 = vand.u32 %v73, 1
    %v76 = vsub.s32 0, %v75
    %v77 = vsel %vm71, %v76, %v75
    %vm78 = vcmp.ne.s32.totalorder %v77, 0
    %vm79 = vcmp.lt.s32.totalorder %v77, 0
    %vm80 = vmand %vm79, %vm78
    %v81 = vadd.s32 %v77, 2
    %v82 = vsel %vm80, %v81, %v77
    %vm83 = vcmp.eq.s32.totalorder %v82, 0
    %v84 = vcvt.s32.f32 %v70
    %v85 = vadd.f32 %v84, 1.0
    %v86 = vsub.f32 %v84, 1.0
    %v87 = vsel %vm83, %v85, %v86
    %88 = vrot.lane.b32.xlu0 %v84, 127
    %v89 = vpop.permute.xlu0 %88
    %vm90 = vcmp.eq.f32.partialorder %v89, %v87
    %s91 = sld [smem:[#allocation2]]
    %s92 = sld [smem:[#allocation2 + $0x81]]
    %v93 = vstv %s91
    %v94 = vstv %s92
    %v95 = vsel %vm83, %v93, %v94
    %s96 = sld [smem:[#allocation2 + $0x80]]
    %s97 = sld [smem:[#allocation2 + $0x1]]
    %v98 = vstv %s96
    %v99 = vstv %s97
    %v100 = vsel %vm83, %v98, %v99
    %s101 = sld [smem:[#allocation4]]
    %s102 = sld [smem:[#allocation4 + $0x1]]
    %v103 = vstv %s101
    %v104 = vstv %s102
    %v105 = vsel %vm83, %v103, %v104
    %v106 = vmul.f32 %v95, %v68
    %107 = vrot.lane.b32.xlu0 %v68, 127
    %v108 = vpop.permute.xlu0 %107
    %109 = vrot.lane.b32.xlu0 %v68, 1
    %v110 = vpop.permute.xlu0 %109
    %v111 = vsel %vm90, %v108, %v110
    %v112 = vmul.f32 %v100, %v111
    %v113 = vadd.f32 %v106, %v112
    %v114 = vadd.f32 %v113, %v105
    %v115 = vmax.f32 %v114, 0.0
    %s116 = sld [smem:[#allocation6]]
    %s117 = sld [smem:[#allocation6 + $0x81]]
    %v118 = vstv %s116
    %v119 = vstv %s117
    %v120 = vsel %vm83, %v118, %v119
    %s121 = sld [smem:[#allocation6 + $0x80]]
    %s122 = sld [smem:[#allocation6 + $0x1]]
    %v123 = vstv %s121
    %v124 = vstv %s122
    %v125 = vsel %vm83, %v123, %v124
    %s126 = sld [smem:[#allocation7]]
    %s127 = sld [smem:[#allocation7 + $0x1]]
    %v128 = vstv %s126
    %v129 = vstv %s127
    %v130 = vsel %vm83, %v128, %v129
    %v131 = vmul.f32 %v120, %v115
    %132 = vrot.lane.b32.xlu0 %v115, 127
    %v133 = vpop.permute.xlu0 %132
    %134 = vrot.lane.b32.xlu0 %v115, 1
    %v135 = vpop.permute.xlu0 %134
    %v136 = vsel %vm90, %v133, %v135
    %v137 = vmul.f32 %v125, %v136
    %v138 = vadd.f32 %v131, %v137
    %v139 = vadd.f32 %v138, %v130
    %140 = vst [vmem:[%s5] sm:$0x1] %v139
    // Predicated region
    $region38: #{example_net_forward.1} parent=1 // pred_check
      _
    $region39: #{example_net_forward.1} parent=1 // pred_check_branch
      %142 = sbr.rel (0) target = $region41
    $region40: #{example_net_forward.1} parent=1 // pred_region
      _
    $region41: #{example_net_forward.1} parent=1 // pred_fallthru
      _
    // Predicated region
    $region42: #{example_net_forward.1} parent=1 // pred_check
      _
    $region43: #{example_net_forward.1} parent=1 // pred_check_branch
      %144 = sbr.rel (0) target = $region45
    $region44: #{example_net_forward.1} parent=1 // pred_region
      _
    $region45: #{example_net_forward.1} parent=1 // pred_fallthru
      _
    %145 = vsyncpa [#allocation3], 1
    %146 = vsyncpa [#allocation5], 1
    %147 = vsyncpa [#allocation8], 1

</llo_original>
